<compile_context>
chip_gen: v6e
topology: v6e:2x2x1
jax: 0.10.0
libtpu: 0.0.40
codegen_flags: <defaults>
</compile_context>

<pallas_src>
import functools

import jax
import jax.numpy as jnp
from jax import lax
from jax.experimental import pallas as pl
from jax.experimental.pallas import tpu as pltpu


def _cov_kernel(z_ref, mu_ref, r_ref, new_mu_ref, new_r_ref,
                s_acc, g_acc, *, la_mu, la_R, n_total):
    """Grid = (branch, n_tile). Accumulates sufficient statistics over n tiles."""
    k = pl.program_id(1)

    @pl.when(k == 0)
    def _init():
        s_acc[...] = jnp.zeros_like(s_acc)
        g_acc[...] = jnp.zeros_like(g_acc)

    z = z_ref[...]                                           # (TN, D) f32

    # Per-tile sufficient statistics: row-sum (VPU/XLU) + Gram (MXU, trans-LHS
    # contraction over the batch dim avoids an explicit transpose).
    s_acc[...] += jnp.sum(z, axis=0, keepdims=True)          # (1, D)
    g_acc[...] += lax.dot_general(
        z, z,
        dimension_numbers=(((0,), (0,)), ((), ())),
        preferred_element_type=jnp.float32,
    )                                                        # (D, D)

    @pl.when(k == pl.num_programs(1) - 1)
    def _finalize():
        inv_n = jnp.float32(1.0 / n_total)
        s = s_acc[...]                                       # (1, D) = sum_n z_n
        mu_update = s * inv_n                                # batch mean
        new_mu = la_mu * mu_ref[...] + (1.0 - la_mu) * mu_update
        new_mu_ref[...] = new_mu

        # z_hat^T z_hat = G - (s^T m + m^T s - N m m^T)
        # Computed as a single tiny (K=2) MXU outer product:
        #   U = [s; m],  V = [m; s - N m]  ->  U^T V = s^T m + m^T s - N m m^T
        u = jnp.concatenate([s, new_mu], axis=0)                              # (2, D)
        v = jnp.concatenate([new_mu, s - jnp.float32(n_total) * new_mu], 0)   # (2, D)
        correction = lax.dot_general(
            u, v,
            dimension_numbers=(((0,), (0,)), ((), ())),
            preferred_element_type=jnp.float32,
        )                                                                     # (D, D)
        r_update = (g_acc[...] - correction) * inv_n
        new_r_ref[...] = la_R * r_ref[...] + (1.0 - la_R) * r_update


def _choose_tile_n(n, target=512):
    """Largest tile <= target that divides n and keeps sublane alignment."""
    tn = min(target, n)
    while tn > 8 and (n % tn != 0 or tn % 8 != 0):
        tn -= 8
    if tn <= 0 or n % tn != 0:
        tn = n        # fall back to full-extent block (always legal)
    return tn


def covariance_ema_update(z_s, mu_s, R_s, *, la_mu, la_R, tile_n=512):
    """One fused pallas_call updating the EMA state of BOTH branches.

    z_s: (2, N, D), mu_s: (2, 1, D), R_s: (2, D, D).  Returns (new_mu, new_R)
    with the same stacked shapes; mu_s / R_s buffers are donated (aliased).
    """
    B, N, D = z_s.shape
    TN = _choose_tile_n(N, tile_n)
    n_tiles = N // TN

    kernel = functools.partial(
        _cov_kernel, la_mu=float(la_mu), la_R=float(la_R), n_total=N)

    new_mu, new_R = pl.pallas_call(
        kernel,
        out_shape=(
            jax.ShapeDtypeStruct((B, 1, D), jnp.float32),
            jax.ShapeDtypeStruct((B, D, D), jnp.float32),
        ),
        grid_spec=pltpu.PrefetchScalarGridSpec(
            num_scalar_prefetch=0,
            grid=(B, n_tiles),
            in_specs=[
                pl.BlockSpec((pl.Squeezed(), TN, D), lambda b, k: (b, k, 0)),
                pl.BlockSpec((pl.Squeezed(), 1, D), lambda b, k: (b, 0, 0)),
                pl.BlockSpec((pl.Squeezed(), D, D), lambda b, k: (b, 0, 0)),
            ],
            out_specs=[
                pl.BlockSpec((pl.Squeezed(), 1, D), lambda b, k: (b, 0, 0)),
                pl.BlockSpec((pl.Squeezed(), D, D), lambda b, k: (b, 0, 0)),
            ],
            scratch_shapes=[
                pltpu.VMEM((1, D), jnp.float32),   # running sum of z
                pltpu.VMEM((D, D), jnp.float32),   # running Gram accumulator
            ],
        ),
        compiler_params=pltpu.CompilerParams(
            dimension_semantics=("parallel", "arbitrary"),
        ),
        # EMA state updated in place (matches PyTorch's in-place .detach()).
        input_output_aliases={1: 0, 2: 1},
        cost_estimate=pl.CostEstimate(
            flops=2 * B * N * D * D,
            transcendentals=0,
            bytes_accessed=4 * B * (N * D + 2 * D * D + 2 * D),
        ),
    )(z_s, mu_s, R_s)
    return new_mu, new_R


def covariance_loss_forward(z1, z2, mu1, mu2, R1, R2, R_eps,
                            *, la_mu, la_R, tile_n=512):
    """Forward pass of CovarianceLoss.

    Returns (cov_loss, new_mu1, new_R1, new_mu2, new_R2) so the EMA state can be
    carried by the caller (functional equivalent of the in-place updates).
    """
    N, D = z1.shape
    z_s = jnp.stack([z1, z2], axis=0)        # (2, N, D)
    mu_s = jnp.stack([mu1, mu2], axis=0)     # (2, 1, D)  (fresh buffers -> donated)
    R_s = jnp.stack([R1, R2], axis=0)        # (2, D, D)

    new_mu, new_R = covariance_ema_update(
        z_s, mu_s, R_s, la_mu=la_mu, la_R=la_R, tile_n=tile_n)

    # Batched Cholesky logdet: R is SPD by construction (la_R*I_prev + PSD).
    A = new_R + R_eps[None, :, :]
    L = jnp.linalg.cholesky(A)
    logdets = 2.0 * jnp.sum(jnp.log(jnp.diagonal(L, axis1=-2, axis2=-1)), axis=-1)
    cov_loss = -(logdets[0] + logdets[1]) / D
    return cov_loss, new_mu[0], new_R[0], new_mu[1], new_R[1]


def _reference(z1, z2, mu1, mu2, R1, R2, R_eps, *, la_mu, la_R):
    N, D = z1.shape
    mu_update1 = jnp.mean(z1, 0)
    mu_update2 = jnp.mean(z2, 0)
    new_mu1 = la_mu * mu1[0] + (1 - la_mu) * mu_update1
    new_mu2 = la_mu * mu2[0] + (1 - la_mu) * mu_update2
    z1_hat = z1 - new_mu1
    z2_hat = z2 - new_mu2
    new_R1 = la_R * R1 + (1 - la_R) * (z1_hat.T @ z1_hat) / N
    new_R2 = la_R * R2 + (1 - la_R) * (z2_hat.T @ z2_hat) / N
    _, ld1 = jnp.linalg.slogdet(new_R1 + R_eps)
    _, ld2 = jnp.linalg.slogdet(new_R2 + R_eps)
    loss = -(ld1 + ld2) / D
    return loss, new_mu1, new_R1, new_mu2, new_R2


if __name__ == "__main__":
    # Hyperparameters (deterministic, in-script; mimic the PyTorch module args).
    proj_output_dim = 32          # D
    batch = 256                   # N (tiled over 128-row blocks -> 2 grid steps)
    R_ini = 1.0
    la_R = 0.01
    la_mu = 0.01
    R_eps_weight = 1e-8

    key = jax.random.PRNGKey(0)
    k1, k2 = jax.random.split(key)
    z1 = jax.random.normal(k1, (batch, proj_output_dim), dtype=jnp.float32)
    z2 = jax.random.normal(k2, (batch, proj_output_dim), dtype=jnp.float32)

    # Initial EMA state (module __init__).
    R1 = R_ini * jnp.eye(proj_output_dim, dtype=jnp.float32)
    R2 = R_ini * jnp.eye(proj_output_dim, dtype=jnp.float32)
    mu1 = jnp.zeros((1, proj_output_dim), dtype=jnp.float32)
    mu2 = jnp.zeros((1, proj_output_dim), dtype=jnp.float32)
    R_eps = R_eps_weight * jnp.eye(proj_output_dim, dtype=jnp.float32)

    loss, new_mu1, new_R1, new_mu2, new_R2 = covariance_loss_forward(
        z1, z2, mu1, mu2, R1, R2, R_eps, la_mu=la_mu, la_R=la_R, tile_n=128)
    jax.block_until_ready((loss, new_mu1, new_R1, new_mu2, new_R2))

    ref_loss, ref_mu1, ref_R1, ref_mu2, ref_R2 = _reference(
        z1, z2, mu1, mu2, R1, R2, R_eps, la_mu=la_mu, la_R=la_R)

    assert jnp.allclose(loss, ref_loss, rtol=1e-3, atol=1e-4), (loss, ref_loss)
    assert jnp.allclose(new_mu1[0], ref_mu1, rtol=1e-3, atol=1e-4)
    assert jnp.allclose(new_mu2[0], ref_mu2, rtol=1e-3, atol=1e-4)
    assert jnp.allclose(new_R1, ref_R1, rtol=1e-3, atol=2e-4)
    assert jnp.allclose(new_R2, ref_R2, rtol=1e-3, atol=2e-4)

    print("KERNEL_OK")
</pallas_src>

<mosaic_0001>
module attributes {stable_mosaic.version = 11 : i64} {
  func.func @_cov_kernel(%arg0: i32, %arg1: i32, %arg2: memref<1x128x32xf32, #tpu.memory_space<vmem>>, %arg3: memref<1x1x32xf32, #tpu.memory_space<vmem>>, %arg4: memref<1x32x32xf32, #tpu.memory_space<vmem>>, %arg5: memref<1x1x32xf32, #tpu.memory_space<vmem>>, %arg6: memref<1x32x32xf32, #tpu.memory_space<vmem>>, %arg7: memref<1x32xf32, #tpu.memory_space<vmem>>, %arg8: memref<32x32xf32, #tpu.memory_space<vmem>>) attributes {dimension_semantics = [#tpu.dimension_semantics<parallel>, #tpu.dimension_semantics<arbitrary>], iteration_bounds = array<i64: 2, 2>, scalar_prefetch = 0 : i64, scratch_operands = 2 : i64, tpu.core_type = #tpu.core_type<tc>, window_params = [{transform_indices = @transform_0, window_bounds = array<i64: 1, 128, 32>}, {transform_indices = @transform_1, window_bounds = array<i64: 1, 1, 32>}, {transform_indices = @transform_2, window_bounds = array<i64: 1, 32, 32>}, {transform_indices = @transform_3, window_bounds = array<i64: 1, 1, 32>}, {transform_indices = @transform_4, window_bounds = array<i64: 1, 32, 32>}]} {
    %c0_i32 = arith.constant 0 : i32
    %0 = arith.cmpi eq, %arg1, %c0_i32 : i32
    %1 = arith.extui %0 : i1 to i32
    %c0_i32_0 = arith.constant 0 : i32
    %2 = arith.cmpi ne, %1, %c0_i32_0 : i32
    scf.if %2 {
      %cst_13 = arith.constant 0.000000e+00 : f32
      %17 = vector.broadcast %cst_13 : f32 to vector<1x32xf32>
      %c0_14 = arith.constant 0 : index
      %c0_15 = arith.constant 0 : index
      %18 = vector.load %arg7[%c0_14, %c0_15] : memref<1x32xf32, #tpu.memory_space<vmem>>, vector<1x32xf32>
      tpu.vector_store %arg7[%c0_14, %c0_15], %17 {strides = array<i32>} : memref<1x32xf32, #tpu.memory_space<vmem>>, vector<1x32xf32>,
      %cst_16 = arith.constant 0.000000e+00 : f32
      %19 = vector.broadcast %cst_16 : f32 to vector<32x32xf32>
      %c0_17 = arith.constant 0 : index
      %c0_18 = arith.constant 0 : index
      %20 = vector.load %arg8[%c0_17, %c0_18] : memref<32x32xf32, #tpu.memory_space<vmem>>, vector<32x32xf32>
      tpu.vector_store %arg8[%c0_17, %c0_18], %19 {strides = array<i32>} : memref<32x32xf32, #tpu.memory_space<vmem>>, vector<32x32xf32>,
    } else {
    }
    %c0 = arith.constant 0 : index
    %c0_1 = arith.constant 0 : index
    %c0_2 = arith.constant 0 : index
    %3 = vector.load %arg2[%c0, %c0_1, %c0_2] : memref<1x128x32xf32, #tpu.memory_space<vmem>>, vector<1x128x32xf32>
    %4 = vector.shape_cast %3 : vector<1x128x32xf32> to vector<128x32xf32>
    %c0_3 = arith.constant 0 : index
    %c0_4 = arith.constant 0 : index
    %5 = vector.load %arg7[%c0_3, %c0_4] : memref<1x32xf32, #tpu.memory_space<vmem>>, vector<1x32xf32>
    %cst = arith.constant dense<0.000000e+00> : vector<32xf32>
    %6 = vector.multi_reduction <add>, %4, %cst [0] : vector<128x32xf32> to vector<32xf32>
    %7 = vector.shape_cast %6 : vector<32xf32> to vector<1x32xf32>
    %8 = arith.addf %5, %7 : vector<1x32xf32>
    %c0_5 = arith.constant 0 : index
    %c0_6 = arith.constant 0 : index
    %9 = vector.load %arg7[%c0_5, %c0_6] : memref<1x32xf32, #tpu.memory_space<vmem>>, vector<1x32xf32>
    tpu.vector_store %arg7[%c0_5, %c0_6], %8 {strides = array<i32>} : memref<1x32xf32, #tpu.memory_space<vmem>>, vector<1x32xf32>,
    %c0_7 = arith.constant 0 : index
    %c0_8 = arith.constant 0 : index
    %10 = vector.load %arg8[%c0_7, %c0_8] : memref<32x32xf32, #tpu.memory_space<vmem>>, vector<32x32xf32>
    %cst_9 = arith.constant dense<0.000000e+00> : vector<32x32xf32>
    %11 = tpu.matmul %4, %4, %cst_9 {dimension_numbers = #tpu.dot_dimension_numbers<[0], [0], [1], [1], [0, 1, 1, 1], [], []>} : vector<128x32xf32>, vector<128x32xf32>, vector<32x32xf32> -> vector<32x32xf32>
    %12 = arith.addf %10, %11 : vector<32x32xf32>
    %c0_10 = arith.constant 0 : index
    %c0_11 = arith.constant 0 : index
    %13 = vector.load %arg8[%c0_10, %c0_11] : memref<32x32xf32, #tpu.memory_space<vmem>>, vector<32x32xf32>
    tpu.vector_store %arg8[%c0_10, %c0_11], %12 {strides = array<i32>} : memref<32x32xf32, #tpu.memory_space<vmem>>, vector<32x32xf32>,
    %c1_i32 = arith.constant 1 : i32
    %14 = arith.cmpi eq, %arg1, %c1_i32 : i32
    %15 = arith.extui %14 : i1 to i32
    %c0_i32_12 = arith.constant 0 : i32
    %16 = arith.cmpi ne, %15, %c0_i32_12 : i32
    scf.if %16 {
      %c0_13 = arith.constant 0 : index
      %c0_14 = arith.constant 0 : index
      %17 = vector.load %arg7[%c0_13, %c0_14] : memref<1x32xf32, #tpu.memory_space<vmem>>, vector<1x32xf32>
      %cst_15 = arith.constant 3.906250e-03 : f32
      %18 = vector.broadcast %cst_15 : f32 to vector<1x32xf32>
      %19 = arith.mulf %17, %18 : vector<1x32xf32>
      %c0_16 = arith.constant 0 : index
      %c0_17 = arith.constant 0 : index
      %c0_18 = arith.constant 0 : index
      %20 = vector.load %arg3[%c0_16, %c0_17, %c0_18] : memref<1x1x32xf32, #tpu.memory_space<vmem>>, vector<1x1x32xf32>
      %21 = vector.shape_cast %20 : vector<1x1x32xf32> to vector<1x32xf32>
      %cst_19 = arith.constant 0.00999999977 : f32
      %22 = vector.broadcast %cst_19 : f32 to vector<1x32xf32>
      %23 = arith.mulf %22, %21 : vector<1x32xf32>
      %cst_20 = arith.constant 9.900000e-01 : f32
      %24 = vector.broadcast %cst_20 : f32 to vector<1x32xf32>
      %25 = arith.mulf %24, %19 : vector<1x32xf32>
      %26 = arith.addf %23, %25 : vector<1x32xf32>
      %c0_21 = arith.constant 0 : index
      %c0_22 = arith.constant 0 : index
      %c0_23 = arith.constant 0 : index
      %27 = vector.load %arg5[%c0_21, %c0_22, %c0_23] : memref<1x1x32xf32, #tpu.memory_space<vmem>>, vector<1x1x32xf32>
      %28 = vector.shape_cast %27 : vector<1x1x32xf32> to vector<1x32xf32>
      %29 = vector.shape_cast %26 : vector<1x32xf32> to vector<1x1x32xf32>
      tpu.vector_store %arg5[%c0_21, %c0_22, %c0_23], %29 {strides = array<i32>} : memref<1x1x32xf32, #tpu.memory_space<vmem>>, vector<1x1x32xf32>,
      %30 = tpu.concatenate %17, %26 in 0 : vector<1x32xf32>, vector<1x32xf32> -> vector<2x32xf32>
      %cst_24 = arith.constant 2.560000e+02 : f32
      %31 = vector.broadcast %cst_24 : f32 to vector<1x32xf32>
      %32 = arith.mulf %31, %26 : vector<1x32xf32>
      %33 = arith.subf %17, %32 : vector<1x32xf32>
      %34 = tpu.concatenate %26, %33 in 0 : vector<1x32xf32>, vector<1x32xf32> -> vector<2x32xf32>
      %cst_25 = arith.constant dense<0.000000e+00> : vector<32x32xf32>
      %35 = tpu.matmul %30, %34, %cst_25 {dimension_numbers = #tpu.dot_dimension_numbers<[0], [0], [1], [1], [0, 1, 1, 1], [], []>} : vector<2x32xf32>, vector<2x32xf32>, vector<32x32xf32> -> vector<32x32xf32>
      %c0_26 = arith.constant 0 : index
      %c0_27 = arith.constant 0 : index
      %36 = vector.load %arg8[%c0_26, %c0_27] : memref<32x32xf32, #tpu.memory_space<vmem>>, vector<32x32xf32>
      %37 = arith.subf %36, %35 : vector<32x32xf32>
      %cst_28 = arith.constant 3.906250e-03 : f32
      %38 = vector.broadcast %cst_28 : f32 to vector<32x32xf32>
      %39 = arith.mulf %37, %38 : vector<32x32xf32>
      %c0_29 = arith.constant 0 : index
      %c0_30 = arith.constant 0 : index
      %c0_31 = arith.constant 0 : index
      %40 = vector.load %arg4[%c0_29, %c0_30, %c0_31] : memref<1x32x32xf32, #tpu.memory_space<vmem>>, vector<1x32x32xf32>
      %41 = vector.shape_cast %40 : vector<1x32x32xf32> to vector<32x32xf32>
      %cst_32 = arith.constant 0.00999999977 : f32
      %42 = vector.broadcast %cst_32 : f32 to vector<32x32xf32>
      %43 = arith.mulf %42, %41 : vector<32x32xf32>
      %cst_33 = arith.constant 9.900000e-01 : f32
      %44 = vector.broadcast %cst_33 : f32 to vector<32x32xf32>
      %45 = arith.mulf %44, %39 : vector<32x32xf32>
      %46 = arith.addf %43, %45 : vector<32x32xf32>
      %c0_34 = arith.constant 0 : index
      %c0_35 = arith.constant 0 : index
      %c0_36 = arith.constant 0 : index
      %47 = vector.load %arg6[%c0_34, %c0_35, %c0_36] : memref<1x32x32xf32, #tpu.memory_space<vmem>>, vector<1x32x32xf32>
      %48 = vector.shape_cast %47 : vector<1x32x32xf32> to vector<32x32xf32>
      %49 = vector.shape_cast %46 : vector<32x32xf32> to vector<1x32x32xf32>
      tpu.vector_store %arg6[%c0_34, %c0_35, %c0_36], %49 {strides = array<i32>} : memref<1x32x32xf32, #tpu.memory_space<vmem>>, vector<1x32x32xf32>,
    } else {
    }
    return
  }
  func.func @transform_0(%arg0: i32, %arg1: i32) -> (i32, i32, i32) {
    %c0_i32 = arith.constant 0 : i32
    %c0_i32_0 = arith.constant 0 : i32
    return %arg0, %arg1, %c0_i32 : i32, i32, i32
  }
  func.func @transform_1(%arg0: i32, %arg1: i32) -> (i32, i32, i32) {
    %c0_i32 = arith.constant 0 : i32
    %c0_i32_0 = arith.constant 0 : i32
    %c0_i32_1 = arith.constant 0 : i32
    return %arg0, %c0_i32, %c0_i32_0 : i32, i32, i32
  }
  func.func @transform_2(%arg0: i32, %arg1: i32) -> (i32, i32, i32) {
    %c0_i32 = arith.constant 0 : i32
    %c0_i32_0 = arith.constant 0 : i32
    %c0_i32_1 = arith.constant 0 : i32
    return %arg0, %c0_i32, %c0_i32_0 : i32, i32, i32
  }
  func.func @transform_3(%arg0: i32, %arg1: i32) -> (i32, i32, i32) {
    %c0_i32 = arith.constant 0 : i32
    %c0_i32_0 = arith.constant 0 : i32
    %c0_i32_1 = arith.constant 0 : i32
    return %arg0, %c0_i32, %c0_i32_0 : i32, i32, i32
  }
  func.func @transform_4(%arg0: i32, %arg1: i32) -> (i32, i32, i32) {
    %c0_i32 = arith.constant 0 : i32
    %c0_i32_0 = arith.constant 0 : i32
    %c0_i32_1 = arith.constant 0 : i32
    return %arg0, %c0_i32, %c0_i32_0 : i32, i32, i32
  }
}

</mosaic_0001>

<llo_original>
// kernel: tpu_custom_call.1
$region0: #{tpu_custom_call.1}
  #allocation0 [shape = 'u32[]', space=smem, size = 0x4, offset = 0x4, fixed_abs, tag = 'smem constant byte address 0x4 - core index']
  #allocation1 [shape = 'u32[144,128]{1,0:T(1,128)}', space=vmem, size = 0x12000, scoped, tag = 'internal scratch']
  #allocation2 [shape = 'f32[1,32]{1,0:T(1,128)}', space=vmem, size = 0x200, scoped, tag = 'scratch operand']
  #allocation3 [shape = 'f32[32,32]{1,0:T(8,128)}', space=vmem, size = 0x4000, scoped, tag = 'scratch operand']
  %s0 = inlined_call_operand.vmem [shape: f32[2,256,32], index: 0, kind: input, shape index: {}]
  %s1 = inlined_call_operand.hbm [shape: f32[2,1,32], index: 1, kind: input, shape index: {}, may-alias: {1,3}]
  %s2 = inlined_call_operand.hbm [shape: f32[2,32,32], index: 2, kind: input, shape index: {}, may-alias: {2,4}]
  %s3 = inlined_call_operand.hbm [shape: f32[2,1,32], index: 3, kind: output, shape index: {0}, may-alias: {1,3}]
  %s4 = inlined_call_operand.hbm [shape: f32[2,32,32], index: 4, kind: output, shape index: {1}, may-alias: {2,4}]
  %5 = xla_tuple %s3, %s4
  %s6 = sld [smem:[#allocation0]]
  $region69: #{tpu_custom_call.1} parent=0
    _
  %s8 = ssub.s32 1, %s6
  %s9 = scalar_select 0, %s8, %s6
  $region1: #{tpu_custom_call.1} parent=0
    #allocation4 [shape = 'u8[1024]{0}', space=vmem, size = 0x400, scoped, tag = 'input window, operand 1']
    #allocation5 [shape = 's32[2]{0}', space=sflag, size = 0x8, scoped, tag = 'scoped memory for tpu_custom_call.1']
    #allocation6 [shape = 's32[2]{0}', space=sflag, size = 0x8, scoped, tag = 'scoped memory for tpu_custom_call.1']
    #allocation7 [shape = 'u8[32768]{0}', space=vmem, size = 0x8000, scoped, tag = 'input window, operand 2']
    #allocation8 [shape = 's32[2]{0}', space=sflag, size = 0x8, scoped, tag = 'scoped memory for tpu_custom_call.1']
    #allocation9 [shape = 'u8[1024]{0}', space=vmem, size = 0x400, scoped, tag = 'output window, operand 0']
    #allocation10 [shape = 'u8[32768]{0}', space=vmem, size = 0x8000, scoped, tag = 'output window, operand 1']
    #allocation11 [shape = 's32[2]{0}', space=sflag, size = 0x8, scoped, tag = 'scoped memory for tpu_custom_call.1']
    %10 = vsyncpa [#allocation5], 0
    %s11 = scalar_lea.sflag [#allocation5], 1
    %12 = vsyncpa %s11, 0
    %13 = vsyncpa [#allocation8], 0
    %s14 = scalar_lea.sflag [#allocation8], 1
    %15 = vsyncpa %s14, 0
    %16 = vsyncpa [#allocation6], 0
    %s17 = scalar_lea.sflag [#allocation6], 1
    %18 = vsyncpa %s17, 0
    %19 = vsyncpa [#allocation11], 0
    %s20 = scalar_lea.sflag [#allocation11], 1
    %21 = vsyncpa %s20, 0
    loop: start=0, step=1, limit=6
    $region2: #{tpu_custom_call.1} parent=1 // loop_pre_header
      _
    $region3: #{tpu_custom_call.1} parent=1 // loop_header
      %s23 = sphi 0, %s27
      %p24 = scmp.ge.s32.totalorder %s23, 6
      %s30 = sphi 0, %s42
      %s31 = sphi 0, %s38
      %s32 = sphi 0, %s30
      %s33 = sphi 0, %s31
      %s34 = sphi 0, %s32
      %s35 = sphi 0, %s33
      %s47 = sphi 0, %s49
      %s50 = sphi 0, %s47
      %s51 = sphi 0, %s50
      %s67 = sphi 0, %s51
      %s73 = sphi 0, %s75
      %s76 = sphi 0, %s73
      %s77 = sphi 0, %s76
      %s93 = sphi 0, %s77
      %s99 = sphi 0, %s101
      %s102 = sphi 0, %s99
      %s103 = sphi 0, %s102
      %s119 = sphi 0, %s103
      %s125 = sphi 0, %s127
      %s128 = sphi 0, %s125
      %s129 = sphi 0, %s128
      %s145 = sphi 0, %s129
      %s151 = sphi 0, %s153
      %s154 = sphi 0, %s151
      %s155 = sphi 0, %s154
      %s171 = sphi 0, %s155
    $region4: #{tpu_custom_call.1} parent=1 // loop_header_branch
      %26 = sbr.rel (%p24) target = $region8
    $region5: #{tpu_custom_call.1} parent=1 // loop_body
      %s28 = ssub.s32 %s23, 1
      %s29 = ssub.s32 %s23, 2
      %s36 = sadd.s32 1, %s31
      %p37 = scmp.ge.s32.totalorder %s36, 2
      %s38 = scalar_select %p37, 0, %s36
      %s39 = sadd.s32 1, %s30
      %s40 = scalar_select %p37, %s39, %s30
      %p41 = scmp.ge.s32.totalorder %s40, 2
      %s42 = scalar_select %p41, 0, %s40
      %s43 = ssub.s32 %s30, %s42
      %s44 = ssub.s32 %s31, %s38
      %s45 = sor.u32 %s43, %s44
      %p46 = scmp.eq.s32.totalorder %s45, 0
      %s48 = sadd.s32 %s47, 1
      %s49 = scalar_select %p46, %s47, %s48
      %p52 = pneg %p46
      %p53 = scmp.eq.s32.totalorder %s23, 3
      %p54 = por %p52, %p53
      %p55 = scmp.ne.s32.totalorder %s47, %s50
      %p56 = scmp.eq.s32.totalorder %s23, 0
      %p57 = por %p55, %p56
      %p58 = scmp.ne.s32.totalorder %s47, %s50
      %p59 = scmp.eq.s32.totalorder %s28, 3
      %p60 = por %p58, %p59
      %p61 = scmp.ne.s32.totalorder %s50, %s51
      %p62 = scmp.eq.s32.totalorder %s28, 0
      %p63 = por %p61, %p62
      %p64 = scmp.ne.s32.totalorder %s50, %s51
      %p65 = scmp.eq.s32.totalorder %s29, 3
      %p66 = por %p64, %p65
      %p68 = scmp.ne.s32.totalorder %s51, %s67
      %p69 = scmp.eq.s32.totalorder %s29, 0
      %p70 = por %p68, %p69
      %s71 = ssub.s32 %s30, %s42
      %p72 = scmp.eq.s32.totalorder %s71, 0
      %s74 = sadd.s32 %s73, 1
      %s75 = scalar_select %p72, %s73, %s74
      %p78 = pneg %p72
      %p79 = scmp.eq.s32.totalorder %s23, 3
      %p80 = por %p78, %p79
      %p81 = scmp.ne.s32.totalorder %s73, %s76
      %p82 = scmp.eq.s32.totalorder %s23, 0
      %p83 = por %p81, %p82
      %p84 = scmp.ne.s32.totalorder %s73, %s76
      %p85 = scmp.eq.s32.totalorder %s28, 3
      %p86 = por %p84, %p85
      %p87 = scmp.ne.s32.totalorder %s76, %s77
      %p88 = scmp.eq.s32.totalorder %s28, 0
      %p89 = por %p87, %p88
      %p90 = scmp.ne.s32.totalorder %s76, %s77
      %p91 = scmp.eq.s32.totalorder %s29, 3
      %p92 = por %p90, %p91
      %p94 = scmp.ne.s32.totalorder %s77, %s93
      %p95 = scmp.eq.s32.totalorder %s29, 0
      %p96 = por %p94, %p95
      %s97 = ssub.s32 %s30, %s42
      %p98 = scmp.eq.s32.totalorder %s97, 0
      %s100 = sadd.s32 %s99, 1
      %s101 = scalar_select %p98, %s99, %s100
      %p104 = pneg %p98
      %p105 = scmp.eq.s32.totalorder %s23, 3
      %p106 = por %p104, %p105
      %p107 = scmp.ne.s32.totalorder %s99, %s102
      %p108 = scmp.eq.s32.totalorder %s23, 0
      %p109 = por %p107, %p108
      %p110 = scmp.ne.s32.totalorder %s99, %s102
      %p111 = scmp.eq.s32.totalorder %s28, 3
      %p112 = por %p110, %p111
      %p113 = scmp.ne.s32.totalorder %s102, %s103
      %p114 = scmp.eq.s32.totalorder %s28, 0
      %p115 = por %p113, %p114
      %p116 = scmp.ne.s32.totalorder %s102, %s103
      %p117 = scmp.eq.s32.totalorder %s29, 3
      %p118 = por %p116, %p117
      %p120 = scmp.ne.s32.totalorder %s103, %s119
      %p121 = scmp.eq.s32.totalorder %s29, 0
      %p122 = por %p120, %p121
      %s123 = ssub.s32 %s30, %s42
      %p124 = scmp.eq.s32.totalorder %s123, 0
      %s126 = sadd.s32 %s125, 1
      %s127 = scalar_select %p124, %s125, %s126
      %p130 = pneg %p124
      %p131 = scmp.eq.s32.totalorder %s23, 3
      %p132 = por %p130, %p131
      %p133 = scmp.ne.s32.totalorder %s125, %s128
      %p134 = scmp.eq.s32.totalorder %s23, 0
      %p135 = por %p133, %p134
      %p136 = scmp.ne.s32.totalorder %s125, %s128
      %p137 = scmp.eq.s32.totalorder %s28, 3
      %p138 = por %p136, %p137
      %p139 = scmp.ne.s32.totalorder %s128, %s129
      %p140 = scmp.eq.s32.totalorder %s28, 0
      %p141 = por %p139, %p140
      %p142 = scmp.ne.s32.totalorder %s128, %s129
      %p143 = scmp.eq.s32.totalorder %s29, 3
      %p144 = por %p142, %p143
      %p146 = scmp.ne.s32.totalorder %s129, %s145
      %p147 = scmp.eq.s32.totalorder %s29, 0
      %p148 = por %p146, %p147
      %s149 = ssub.s32 %s30, %s42
      %p150 = scmp.eq.s32.totalorder %s149, 0
      %s152 = sadd.s32 %s151, 1
      %s153 = scalar_select %p150, %s151, %s152
      %p156 = pneg %p150
      %p157 = scmp.eq.s32.totalorder %s23, 3
      %p158 = por %p156, %p157
      %p159 = scmp.ne.s32.totalorder %s151, %s154
      %p160 = scmp.eq.s32.totalorder %s23, 0
      %p161 = por %p159, %p160
      %p162 = scmp.ne.s32.totalorder %s151, %s154
      %p163 = scmp.eq.s32.totalorder %s28, 3
      %p164 = por %p162, %p163
      %p165 = scmp.ne.s32.totalorder %s154, %s155
      %p166 = scmp.eq.s32.totalorder %s28, 0
      %p167 = por %p165, %p166
      %p168 = scmp.ne.s32.totalorder %s154, %s155
      %p169 = scmp.eq.s32.totalorder %s29, 3
      %p170 = por %p168, %p169
      %p172 = scmp.ne.s32.totalorder %s155, %s171
      %p173 = scmp.eq.s32.totalorder %s29, 0
      %p174 = por %p172, %p173
      %p175 = scmp.le.s32.totalorder 1, %s23
      %p176 = scmp.lt.s32.totalorder %s23, 5
      %p177 = pnand %p175, %p176
      %p178 = pneg %p177
      // Predicated region
      $region9: #{tpu_custom_call.1} parent=5 // pred_check
        _
      $region10: #{tpu_custom_call.1} parent=5 // pred_check_branch
        %180 = sbr.rel (%p177) target = $region12
      $region11: #{tpu_custom_call.1} parent=5 // pred_region
        %s181 = ssub.s32 %s23, 1
      $region12: #{tpu_custom_call.1} parent=5 // pred_fallthru
        _
      %p182 = scmp.lt.s32.totalorder %s23, 4
      // Predicated region
      $region13: #{tpu_custom_call.1} parent=5 // pred_check
        %p183 = pneg %p182
      $region14: #{tpu_custom_call.1} parent=5 // pred_check_branch
        %185 = sbr.rel (%p183) target = $region16
      $region15: #{tpu_custom_call.1} parent=5 // pred_region
        // Predicated region
        $region17: #{tpu_custom_call.1} parent=15 // pred_check
          %p186 = pneg %p57
        $region18: #{tpu_custom_call.1} parent=15 // pred_check_branch
          %188 = sbr.rel (%p186) target = $region20
        $region19: #{tpu_custom_call.1} parent=15 // pred_region
          %s189 = smul.u32 16, %s31
          %p190 = scmp.lt.s32.totalorder %s30, 1
          %s191 = scalar_select %p190, %s30, 1
          %p192 = scmp.lt.s32.totalorder %s189, 31
          %s193 = scalar_select %p192, %s189, 31
          %s194 = smul.addr %s191, 32
          %s195 = sadd.s32 %s193, %s194
          %s196 = smul.addr %s195, 8
          %s197 = scalar_lea.vmem %s0, %s196
          %s198 = smul.u32 16, %s31
        $region20: #{tpu_custom_call.1} parent=15 // pred_fallthru
          _
        // Predicated region
        $region21: #{tpu_custom_call.1} parent=15 // pred_check
          %p199 = pneg %p83
        $region22: #{tpu_custom_call.1} parent=15 // pred_check_branch
          %201 = sbr.rel (%p199) target = $region24
        $region23: #{tpu_custom_call.1} parent=15 // pred_region
          %s202 = sand.u32 %s73, 1
          %s203 = scalar_lea.sflag [#allocation5], %s202
          %s204 = sand.u32 %s73, 1
          %s205 = scalar_lea.vmem [#allocation4], %s204
          %s207 = ssub.s32 16, 16
          %208 = vsyncadd %s203, %s207
          %s209 = smul.addr %s30, 16
          %s210 = scalar_lea.hbm %s1, %s209
          %s212 = sshll.u32 %s205, 4
          %s213 = int_to_ptr.vmem [resolvable:$true] %s212
          %215 = dma.hbm_to_vmem [thread:$0]  %s210, 16, %s213, %s203
        $region24: #{tpu_custom_call.1} parent=15 // pred_fallthru
          _
        // Predicated region
        $region25: #{tpu_custom_call.1} parent=15 // pred_check
          %p216 = pneg %p109
        $region26: #{tpu_custom_call.1} parent=15 // pred_check_branch
          %218 = sbr.rel (%p216) target = $region28
        $region27: #{tpu_custom_call.1} parent=15 // pred_region
          %s219 = sand.u32 %s99, 1
          %s220 = scalar_lea.sflag [#allocation8], %s219
          %s221 = sand.u32 %s99, 1
          %s222 = smul.addr %s221, 32
          %s223 = scalar_lea.vmem [#allocation7], %s222
          %s225 = ssub.s32 512, 512
          %226 = vsyncadd %s220, %s225
          %s227 = smul.addr %s30, 4
          %s228 = smul.addr %s227, 128
          %s229 = scalar_lea.hbm %s2, %s228
          %s230 = sshll.u32 %s223, 4
          %s231 = int_to_ptr.vmem [resolvable:$true] %s230
          %236 = dma.hbm_to_vmem [thread:$0]  %s229, 512, %s231, %s220, 128, 128, 8
        $region28: #{tpu_custom_call.1} parent=15 // pred_fallthru
          _
      $region16: #{tpu_custom_call.1} parent=5 // pred_fallthru
        _
      %p237 = scmp.le.s32.totalorder 1, %s23
      %p238 = scmp.lt.s32.totalorder %s23, 5
      %p239 = pnand %p237, %p238
      %p240 = pneg %p239
      // Predicated region
      $region29: #{tpu_custom_call.1} parent=5 // pred_check
        _
      $region30: #{tpu_custom_call.1} parent=5 // pred_check_branch
        %242 = sbr.rel (%p239) target = $region32
      $region31: #{tpu_custom_call.1} parent=5 // pred_region
        %s243 = ssub.s32 %s23, 1
        %s244 = sand.u32 %s76, 1
        %s245 = scalar_lea.sflag [#allocation5], %s244
        %s246 = sand.u32 %s76, 1
        %s247 = scalar_lea.vmem [#allocation4], %s246
        // Predicated region
        $region33: #{tpu_custom_call.1} parent=31 // pred_check
          %p248 = pneg %p89
        $region34: #{tpu_custom_call.1} parent=31 // pred_check_branch
          %250 = sbr.rel (%p248) target = $region36
        $region35: #{tpu_custom_call.1} parent=31 // pred_region
          %251 = dma.done %s245, 16
        $region36: #{tpu_custom_call.1} parent=31 // pred_fallthru
          _
        %s252 = sand.u32 %s102, 1
        %s253 = scalar_lea.sflag [#allocation8], %s252
        %s254 = sand.u32 %s102, 1
        %s255 = smul.addr %s254, 32
        %s256 = scalar_lea.vmem [#allocation7], %s255
        // Predicated region
        $region37: #{tpu_custom_call.1} parent=31 // pred_check
          %p257 = pneg %p115
        $region38: #{tpu_custom_call.1} parent=31 // pred_check_branch
          %259 = sbr.rel (%p257) target = $region40
        $region39: #{tpu_custom_call.1} parent=31 // pred_region
          %260 = dma.done %s253, 512
        $region40: #{tpu_custom_call.1} parent=31 // pred_fallthru
          _
        %s261 = smul.u32 16, %s33
        %p262 = scmp.lt.s32.totalorder %s32, 1
        %s263 = scalar_select %p262, %s32, 1
        %p264 = scmp.lt.s32.totalorder %s261, 31
        %s265 = scalar_select %p264, %s261, 31
        %s266 = smul.addr %s263, 32
        %s267 = sadd.s32 %s265, %s266
        %s268 = smul.addr %s267, 8
        %s269 = scalar_lea.vmem %s0, %s268
        %p270 = pneg %p63
        %p271 = pneg %p60
        %s272 = sand.u32 %s76, 1
        %s273 = scalar_lea.sflag [#allocation5], %s272
        %s274 = sand.u32 %s76, 1
        %s275 = scalar_lea.vmem [#allocation4], %s274
        %p276 = pneg %p89
        %p277 = pneg %p86
        %s278 = sand.u32 %s102, 1
        %s279 = scalar_lea.sflag [#allocation8], %s278
        %s280 = sand.u32 %s102, 1
        %s281 = smul.addr %s280, 32
        %s282 = scalar_lea.vmem [#allocation7], %s281
        %p283 = pneg %p115
        %p284 = pneg %p112
        %p285 = pneg %p141
        %p286 = pneg %p138
        %s287 = sand.u32 %s128, 1
        %s288 = scalar_lea.sflag [#allocation6], %s287
        %s289 = sand.u32 %s128, 1
        %s290 = scalar_lea.vmem [#allocation9], %s289
        %p291 = pneg %p167
        %p292 = pneg %p164
        %s293 = sand.u32 %s154, 1
        %s294 = scalar_lea.sflag [#allocation11], %s293
        %s295 = sand.u32 %s154, 1
        %s296 = smul.addr %s295, 32
        %s297 = scalar_lea.vmem [#allocation10], %s296
        %s298 = smul.u32 16, %s33
        %p299 = scmp.lt.s32.totalorder %s32, 1
        %s300 = scalar_select %p299, %s32, 1
        %p301 = scmp.lt.s32.totalorder %s298, 31
        %s302 = scalar_select %p301, %s298, 31
        %s303 = smul.addr %s300, 32
        %s304 = sadd.s32 %s302, %s303
        %s305 = smul.addr %s304, 8
        %s306 = scalar_lea.vmem %s0, %s305
        %s307 = smul.u32 16, %s33
        %p308 = scmp.eq.s32.totalorder %s33, 0
        // Predicated region
        $region41: #{tpu_custom_call.1} parent=31 // pred_check
          %p309 = pneg %p308
        $region42: #{tpu_custom_call.1} parent=31 // pred_check_branch
          %311 = sbr.rel (%p309) target = $region44
        $region43: #{tpu_custom_call.1} parent=31 // pred_region
          %vm312 = vcmask 253952
          %313 = vst.msk [vmem:[#allocation2] sm:$0x1] %vm312, 0.0
          %vm314 = vcmask 261120
          %315 = vst.msk [vmem:[#allocation3] sm:$0xff] %vm314, 0.0
          %316 = vst.msk [vmem:[#allocation3 + $0x8] sm:$0xff] %vm314, 0.0
          %317 = vst.msk [vmem:[#allocation3 + $0x10] sm:$0xff] %vm314, 0.0
          %318 = vst.msk [vmem:[#allocation3 + $0x18] sm:$0xff] %vm314, 0.0
        $region44: #{tpu_custom_call.1} parent=31 // pred_fallthru
          _
        %v319 = vld [vmem:[%s306] sm:$0xff]
        %v320 = vld [vmem:[%s306 + $0x8] sm:$0xff]
        %v321 = vld [vmem:[%s306 + $0x10] sm:$0xff]
        %v322 = vld [vmem:[%s306 + $0x18] sm:$0xff]
        %v323 = vld [vmem:[%s306 + $0x20] sm:$0xff]
        %v324 = vld [vmem:[%s306 + $0x28] sm:$0xff]
        %v325 = vld [vmem:[%s306 + $0x30] sm:$0xff]
        %v326 = vld [vmem:[%s306 + $0x38] sm:$0xff]
        %v327 = vld [vmem:[%s306 + $0x40] sm:$0xff]
        %v328 = vld [vmem:[%s306 + $0x48] sm:$0xff]
        %v329 = vld [vmem:[%s306 + $0x50] sm:$0xff]
        %v330 = vld [vmem:[%s306 + $0x58] sm:$0xff]
        %v331 = vld [vmem:[%s306 + $0x60] sm:$0xff]
        %v332 = vld [vmem:[%s306 + $0x68] sm:$0xff]
        %v333 = vld [vmem:[%s306 + $0x70] sm:$0xff]
        %v334 = vld [vmem:[%s306 + $0x78] sm:$0xff]
        %v335 = vld [vmem:[#allocation2] sm:$0x1]
        %vm336 = vcmask 261120
        %v337 = vsel %vm336, %v319, 0.0
        %v338 = vsel %vm336, %v320, 0.0
        %v339 = vadd.f32 %v337, %v338
        %v340 = vsel %vm336, %v321, 0.0
        %v341 = vadd.f32 %v339, %v340
        %v342 = vsel %vm336, %v322, 0.0
        %v343 = vadd.f32 %v341, %v342
        %v344 = vsel %vm336, %v323, 0.0
        %v345 = vadd.f32 %v343, %v344
        %v346 = vsel %vm336, %v324, 0.0
        %v347 = vadd.f32 %v345, %v346
        %v348 = vsel %vm336, %v325, 0.0
        %v349 = vadd.f32 %v347, %v348
        %v350 = vsel %vm336, %v326, 0.0
        %v351 = vadd.f32 %v349, %v350
        %v352 = vsel %vm336, %v327, 0.0
        %v353 = vadd.f32 %v351, %v352
        %v354 = vsel %vm336, %v328, 0.0
        %v355 = vadd.f32 %v353, %v354
        %v356 = vsel %vm336, %v329, 0.0
        %v357 = vadd.f32 %v355, %v356
        %v358 = vsel %vm336, %v330, 0.0
        %v359 = vadd.f32 %v357, %v358
        %v360 = vsel %vm336, %v331, 0.0
        %v361 = vadd.f32 %v359, %v360
        %v362 = vsel %vm336, %v332, 0.0
        %v363 = vadd.f32 %v361, %v362
        %v364 = vsel %vm336, %v333, 0.0
        %v365 = vadd.f32 %v363, %v364
        %v366 = vsel %vm336, %v334, 0.0
        %v367 = vadd.f32 %v365, %v366
        %v368 = vrot.slane %v367, 4
        %v369 = vadd.f32 %v367, %v368
        %v370 = vrot.slane %v369, 2
        %v371 = vadd.f32 %v369, %v370
        %v372 = vrot.slane %v371, 1
        %v373 = vadd.f32 %v371, %v372
        %v374 = vadd.f32 %v335, %v373
        %vm375 = vcmask 253952
        %376 = vst.msk [vmem:[#allocation2] sm:$0x1] %vm375, %v374
        %v377 = vld [vmem:[#allocation3] sm:$0xff]
        %v378 = vld [vmem:[#allocation3 + $0x8] sm:$0xff]
        %v379 = vld [vmem:[#allocation3 + $0x10] sm:$0xff]
        %v380 = vld [vmem:[#allocation3 + $0x18] sm:$0xff]
        %381 = vxpose.xlu0.b32.start [1/16] %v319, 128
        %382 = vxpose.xlu0.b32.cont [2/16] %v320, 128
        %383 = vxpose.xlu0.b32.cont [3/16] %v321, 128
        %384 = vxpose.xlu0.b32.cont [4/16] %v322, 128
        %385 = vxpose.xlu0.b32.cont [5/16] %v323, 128
        %386 = vxpose.xlu0.b32.cont [6/16] %v324, 128
        %387 = vxpose.xlu0.b32.cont [7/16] %v325, 128
        %388 = vxpose.xlu0.b32.cont [8/16] %v326, 128
        %389 = vxpose.xlu0.b32.cont [9/16] %v327, 128
        %390 = vxpose.xlu0.b32.cont [10/16] %v328, 128
        %391 = vxpose.xlu0.b32.cont [11/16] %v329, 128
        %392 = vxpose.xlu0.b32.cont [12/16] %v330, 128
        %393 = vxpose.xlu0.b32.cont [13/16] %v331, 128
        %394 = vxpose.xlu0.b32.cont [14/16] %v332, 128
        %395 = vxpose.xlu0.b32.cont [15/16] %v333, 128
        %396 = vxpose.xlu0.b32.end [16/16] %v334, 128
        %v397 = vpop.trf.xlu0
        %v398 = vpop.trf.xlu0
        %v399 = vpop.trf.xlu0
        %v400 = vpop.trf.xlu0
        %v401 = vpop.trf.xlu0
        %v402 = vpop.trf.xlu0
        %v403 = vpop.trf.xlu0
        %v404 = vpop.trf.xlu0
        %v405 = vpop.trf.xlu0
        %v406 = vpop.trf.xlu0
        %v407 = vpop.trf.xlu0
        %v408 = vpop.trf.xlu0
        %v409 = vpop.trf.xlu0
        %v410 = vpop.trf.xlu0
        %v411 = vpop.trf.xlu0
        %v412 = vpop.trf.xlu0
        %413 = vmatprep.subr.mxu0 0.0
        %414 = vmatpush1.msra.mxu0 %v334
        %415 = vmatprep.subr.mxu0 0.0
        %416 = vmatpush1.msra.mxu0 %v333
        %417 = vmatprep.subr.mxu0 0.0
        %418 = vmatpush1.msra.mxu0 %v332
        %419 = vmatprep.subr.mxu0 0.0
        %420 = vmatpush1.msra.mxu0 %v331
        %421 = vmatprep.subr.mxu0 0.0
        %422 = vmatpush1.msra.mxu0 %v330
        %423 = vmatprep.subr.mxu0 0.0
        %424 = vmatpush1.msra.mxu0 %v329
        %425 = vmatprep.subr.mxu0 0.0
        %426 = vmatpush1.msra.mxu0 %v328
        %427 = vmatprep.subr.mxu0 0.0
        %428 = vmatpush1.msra.mxu0 %v327
        %429 = vmatprep.subr.mxu0 0.0
        %430 = vmatpush1.msra.mxu0 %v326
        %431 = vmatprep.subr.mxu0 0.0
        %432 = vmatpush1.msra.mxu0 %v325
        %433 = vmatprep.subr.mxu0 0.0
        %434 = vmatpush1.msra.mxu0 %v324
        %435 = vmatprep.subr.mxu0 0.0
        %436 = vmatpush1.msra.mxu0 %v323
        %437 = vmatprep.subr.mxu0 0.0
        %438 = vmatpush1.msra.mxu0 %v322
        %439 = vmatprep.subr.mxu0 0.0
        %440 = vmatpush1.msra.mxu0 %v321
        %441 = vmatprep.subr.mxu0 0.0
        %442 = vmatpush1.msra.mxu0 %v320
        %443 = vmatprep.subr.mxu0 0.0
        %444 = vmatpush1.msra.mxu0 %v319
        %445 = vmatprep.subr.mxu0 0.0
        %446 = vmatpush2.msra.mxu0 0.0
        %447 = vmatprep.subr.mxu0 0.0
        %448 = vmatpush2.msra.mxu0 0.0
        %449 = vmatprep.subr.mxu0 0.0
        %450 = vmatpush2.msra.mxu0 0.0
        %451 = vmatprep.subr.mxu0 0.0
        %452 = vmatpush2.msra.mxu0 0.0
        %453 = vmatprep.subr.mxu0 0.0
        %454 = vmatpush2.msra.mxu0 0.0
        %455 = vmatprep.subr.mxu0 0.0
        %456 = vmatpush2.msra.mxu0 0.0
        %457 = vmatprep.subr.mxu0 0.0
        %458 = vmatpush2.msra.mxu0 0.0
        %459 = vmatprep.subr.mxu0 0.0
        %460 = vmatpush2.msra.mxu0 0.0
        %461 = vmatprep.subr.mxu0 0.0
        %462 = vmatpush2.msra.mxu0 0.0
        %463 = vmatprep.subr.mxu0 0.0
        %464 = vmatpush2.msra.mxu0 0.0
        %465 = vmatprep.subr.mxu0 0.0
        %466 = vmatpush2.msra.mxu0 0.0
        %467 = vmatprep.subr.mxu0 0.0
        %468 = vmatpush2.msra.mxu0 0.0
        %469 = vmatprep.subr.mxu0 0.0
        %470 = vmatpush2.msra.mxu0 0.0
        %471 = vmatprep.subr.mxu0 0.0
        %472 = vmatpush2.msra.mxu0 0.0
        %473 = vmatprep.subr.mxu0 0.0
        %474 = vmatpush2.msra.mxu0 0.0
        %475 = vmatprep.subr.mxu0 0.0
        %476 = vmatpush2.msra.mxu0 0.0
        %477 = vmatprep.mubr.f32.mxu0 0.0
        %478 = vmatmul.mubr.f32.gmra.mxu0 %v397
        %v479 = vpop.f32.mrf.mxu0
        %v480 = vadd.f32 0.0, %v479
        %v481 = vpop.f32.mrf.mxu0
        %482 = vmatprep.mubr.f32.mxu0 0.0
        %483 = vmatmul.mubr.f32.gmra.mxu0 %v398
        %v484 = vpop.f32.mrf.mxu0
        %v485 = vadd.f32 0.0, %v484
        %v486 = vpop.f32.mrf.mxu0
        %487 = vmatprep.mubr.f32.mxu0 0.0
        %488 = vmatmul.mubr.f32.gmra.mxu0 %v399
        %v489 = vpop.f32.mrf.mxu0
        %v490 = vadd.f32 0.0, %v489
        %v491 = vpop.f32.mrf.mxu0
        %492 = vmatprep.mubr.f32.mxu0 0.0
        %493 = vmatmul.mubr.f32.gmra.mxu0 %v400
        %v494 = vpop.f32.mrf.mxu0
        %v495 = vadd.f32 0.0, %v494
        %v496 = vpop.f32.mrf.mxu0
        %497 = vdwg.mxu0
        %v498 = vadd.f32 %v377, %v480
        %v499 = vadd.f32 %v378, %v485
        %v500 = vadd.f32 %v379, %v490
        %v501 = vadd.f32 %v380, %v495
        %502 = vst.msk [vmem:[#allocation3] sm:$0xff] %vm336, %v498
        %503 = vst.msk [vmem:[#allocation3 + $0x8] sm:$0xff] %vm336, %v499
        %504 = vst.msk [vmem:[#allocation3 + $0x10] sm:$0xff] %vm336, %v500
        %505 = vst.msk [vmem:[#allocation3 + $0x18] sm:$0xff] %vm336, %v501
        %p506 = scmp.eq.s32.totalorder %s33, 1
        // Predicated region
        $region45: #{tpu_custom_call.1} parent=31 // pred_check
          %p507 = pneg %p506
        $region46: #{tpu_custom_call.1} parent=31 // pred_check_branch
          %509 = sbr.rel (%p507) target = $region48
        $region47: #{tpu_custom_call.1} parent=31 // pred_region
          %v510 = vld [vmem:[#allocation2] sm:$0x1]
          %v511 = vmul.f32 %v510, 0.00390625
          %v512 = vld [vmem:[%s247] sm:$0x1]
          %v513 = vmul.f32 %v512, 0.01
          %v514 = vmul.f32 %v511, 0.99
          %v515 = vadd.f32 %v513, %v514
          %516 = vst.msk [vmem:[%s290] sm:$0x1] %vm375, %v515
          %v518 = vlaneseq
          %v519 = vshrl.u32 %v518, 7
          %v520 = vsub.s32 0, %v519
          %v521 = vrot.slane %v515, %v520
          %vm523 = vcmask 1040384
          %v524 = vsel %vm523, %v510, %v521
          %v525 = vmul.f32 %v515, 256.0
          %v526 = vsub.f32 %v510, %v525
          %v528 = vlaneseq
          %v529 = vshrl.u32 %v528, 7
          %v530 = vsub.s32 0, %v529
          %v531 = vrot.slane %v526, %v530
          %v533 = vsel %vm523, %v515, %v531
          %534 = vxpose.xlu0.b32.start [1/16] %v524, 128
          %535 = vxpose.xlu0.b32.cont [2/16] 0.0, 128
          %536 = vxpose.xlu0.b32.cont [3/16] 0.0, 128
          %537 = vxpose.xlu0.b32.cont [4/16] 0.0, 128
          %538 = vxpose.xlu0.b32.cont [5/16] 0.0, 128
          %539 = vxpose.xlu0.b32.cont [6/16] 0.0, 128
          %540 = vxpose.xlu0.b32.cont [7/16] 0.0, 128
          %541 = vxpose.xlu0.b32.cont [8/16] 0.0, 128
          %542 = vxpose.xlu0.b32.cont [9/16] 0.0, 128
          %543 = vxpose.xlu0.b32.cont [10/16] 0.0, 128
          %544 = vxpose.xlu0.b32.cont [11/16] 0.0, 128
          %545 = vxpose.xlu0.b32.cont [12/16] 0.0, 128
          %546 = vxpose.xlu0.b32.cont [13/16] 0.0, 128
          %547 = vxpose.xlu0.b32.cont [14/16] 0.0, 128
          %548 = vxpose.xlu0.b32.cont [15/16] 0.0, 128
          %549 = vxpose.xlu0.b32.end [16/16] 0.0, 128
          %v550 = vpop.trf.xlu0
          %v551 = vpop.trf.xlu0
          %v552 = vpop.trf.xlu0
          %v553 = vpop.trf.xlu0
          %v554 = vpop.trf.xlu0
          %v555 = vpop.trf.xlu0
          %v556 = vpop.trf.xlu0
          %v557 = vpop.trf.xlu0
          %v558 = vpop.trf.xlu0
          %v559 = vpop.trf.xlu0
          %v560 = vpop.trf.xlu0
          %v561 = vpop.trf.xlu0
          %v562 = vpop.trf.xlu0
          %v563 = vpop.trf.xlu0
          %v564 = vpop.trf.xlu0
          %v565 = vpop.trf.xlu0
          %vm566 = vcmask 15360
          %v568 = vsel %vm566, %v550, 0
          %v571 = vsel %vm566, %v551, 0
          %v574 = vsel %vm566, %v552, 0
          %v577 = vsel %vm566, %v553, 0
          %vm579 = vcmask 1041408
          %v581 = vsel %vm579, %v533, 0
          %583 = vmatprep.subr.mxu0 0.0
          %584 = vmatpush1.msra.mxu0 0.0
          %585 = vmatprep.subr.mxu0 0.0
          %586 = vmatpush1.msra.mxu0 0.0
          %587 = vmatprep.subr.mxu0 0.0
          %588 = vmatpush1.msra.mxu0 0.0
          %589 = vmatprep.subr.mxu0 0.0
          %590 = vmatpush1.msra.mxu0 0.0
          %591 = vmatprep.subr.mxu0 0.0
          %592 = vmatpush1.msra.mxu0 0.0
          %593 = vmatprep.subr.mxu0 0.0
          %594 = vmatpush1.msra.mxu0 0.0
          %595 = vmatprep.subr.mxu0 0.0
          %596 = vmatpush1.msra.mxu0 0.0
          %597 = vmatprep.subr.mxu0 0.0
          %598 = vmatpush1.msra.mxu0 0.0
          %599 = vmatprep.subr.mxu0 0.0
          %600 = vmatpush1.msra.mxu0 0.0
          %601 = vmatprep.subr.mxu0 0.0
          %602 = vmatpush1.msra.mxu0 0.0
          %603 = vmatprep.subr.mxu0 0.0
          %604 = vmatpush1.msra.mxu0 0.0
          %605 = vmatprep.subr.mxu0 0.0
          %606 = vmatpush1.msra.mxu0 0.0
          %607 = vmatprep.subr.mxu0 0.0
          %608 = vmatpush1.msra.mxu0 0.0
          %609 = vmatprep.subr.mxu0 0.0
          %610 = vmatpush1.msra.mxu0 0.0
          %611 = vmatprep.subr.mxu0 0.0
          %612 = vmatpush1.msra.mxu0 0.0
          %613 = vmatprep.subr.mxu0 0.0
          %614 = vmatpush1.msra.mxu0 %v581
          %615 = vmatprep.subr.mxu0 0.0
          %616 = vmatpush2.msra.mxu0 0.0
          %617 = vmatprep.subr.mxu0 0.0
          %618 = vmatpush2.msra.mxu0 0.0
          %619 = vmatprep.subr.mxu0 0.0
          %620 = vmatpush2.msra.mxu0 0.0
          %621 = vmatprep.subr.mxu0 0.0
          %622 = vmatpush2.msra.mxu0 0.0
          %623 = vmatprep.subr.mxu0 0.0
          %624 = vmatpush2.msra.mxu0 0.0
          %625 = vmatprep.subr.mxu0 0.0
          %626 = vmatpush2.msra.mxu0 0.0
          %627 = vmatprep.subr.mxu0 0.0
          %628 = vmatpush2.msra.mxu0 0.0
          %629 = vmatprep.subr.mxu0 0.0
          %630 = vmatpush2.msra.mxu0 0.0
          %631 = vmatprep.subr.mxu0 0.0
          %632 = vmatpush2.msra.mxu0 0.0
          %633 = vmatprep.subr.mxu0 0.0
          %634 = vmatpush2.msra.mxu0 0.0
          %635 = vmatprep.subr.mxu0 0.0
          %636 = vmatpush2.msra.mxu0 0.0
          %637 = vmatprep.subr.mxu0 0.0
          %638 = vmatpush2.msra.mxu0 0.0
          %639 = vmatprep.subr.mxu0 0.0
          %640 = vmatpush2.msra.mxu0 0.0
          %641 = vmatprep.subr.mxu0 0.0
          %642 = vmatpush2.msra.mxu0 0.0
          %643 = vmatprep.subr.mxu0 0.0
          %644 = vmatpush2.msra.mxu0 0.0
          %645 = vmatprep.subr.mxu0 0.0
          %646 = vmatpush2.msra.mxu0 0.0
          %647 = vmatprep.mubr.f32.mxu0 0.0
          %648 = vmatmul.mubr.f32.gmra.mxu0 %v568
          %v649 = vpop.f32.mrf.mxu0
          %v650 = vadd.f32 0.0, %v649
          %v651 = vpop.f32.mrf.mxu0
          %652 = vmatprep.mubr.f32.mxu0 0.0
          %653 = vmatmul.mubr.f32.gmra.mxu0 %v571
          %v654 = vpop.f32.mrf.mxu0
          %v655 = vadd.f32 0.0, %v654
          %v656 = vpop.f32.mrf.mxu0
          %657 = vmatprep.mubr.f32.mxu0 0.0
          %658 = vmatmul.mubr.f32.gmra.mxu0 %v574
          %v659 = vpop.f32.mrf.mxu0
          %v660 = vadd.f32 0.0, %v659
          %v661 = vpop.f32.mrf.mxu0
          %662 = vmatprep.mubr.f32.mxu0 0.0
          %663 = vmatmul.mubr.f32.gmra.mxu0 %v577
          %v664 = vpop.f32.mrf.mxu0
          %v665 = vadd.f32 0.0, %v664
          %v666 = vpop.f32.mrf.mxu0
          %667 = vdwg.mxu0
          %v668 = vld [vmem:[#allocation3] sm:$0xff]
          %v669 = vld [vmem:[#allocation3 + $0x8] sm:$0xff]
          %v670 = vld [vmem:[#allocation3 + $0x10] sm:$0xff]
          %v671 = vld [vmem:[#allocation3 + $0x18] sm:$0xff]
          %v672 = vsub.f32 %v668, %v650
          %v673 = vsub.f32 %v669, %v655
          %v674 = vsub.f32 %v670, %v660
          %v675 = vsub.f32 %v671, %v665
          %v676 = vmul.f32 %v672, 0.00390625
          %v677 = vmul.f32 %v673, 0.00390625
          %v678 = vmul.f32 %v674, 0.00390625
          %v679 = vmul.f32 %v675, 0.00390625
          %v680 = vld [vmem:[%s256] sm:$0xff]
          %v681 = vld [vmem:[%s256 + $0x8] sm:$0xff]
          %v682 = vld [vmem:[%s256 + $0x10] sm:$0xff]
          %v683 = vld [vmem:[%s256 + $0x18] sm:$0xff]
          %v684 = vmul.f32 %v680, 0.01
          %v685 = vmul.f32 %v681, 0.01
          %v686 = vmul.f32 %v682, 0.01
          %v687 = vmul.f32 %v683, 0.01
          %v688 = vmul.f32 %v676, 0.99
          %v689 = vmul.f32 %v677, 0.99
          %v690 = vmul.f32 %v678, 0.99
          %v691 = vmul.f32 %v679, 0.99
          %v692 = vadd.f32 %v684, %v688
          %v693 = vadd.f32 %v685, %v689
          %v694 = vadd.f32 %v686, %v690
          %v695 = vadd.f32 %v687, %v691
          %696 = vst.msk [vmem:[%s297] sm:$0xff] %vm336, %v692
          %697 = vst.msk [vmem:[%s297 + $0x8] sm:$0xff] %vm336, %v693
          %698 = vst.msk [vmem:[%s297 + $0x10] sm:$0xff] %vm336, %v694
          %699 = vst.msk [vmem:[%s297 + $0x18] sm:$0xff] %vm336, %v695
        $region48: #{tpu_custom_call.1} parent=31 // pred_fallthru
          _
        %s700 = sand.u32 %s128, 1
        %s701 = scalar_lea.sflag [#allocation6], %s700
        %s702 = sand.u32 %s128, 1
        %s703 = scalar_lea.vmem [#allocation9], %s702
        %s704 = sand.u32 %s154, 1
        %s705 = scalar_lea.sflag [#allocation11], %s704
        %s706 = sand.u32 %s154, 1
        %s707 = smul.addr %s706, 32
        %s708 = scalar_lea.vmem [#allocation10], %s707
        // Predicated region
        $region49: #{tpu_custom_call.1} parent=31 // pred_check
          %p709 = pneg %p138
        $region50: #{tpu_custom_call.1} parent=31 // pred_check_branch
          %711 = sbr.rel (%p709) target = $region52
        $region51: #{tpu_custom_call.1} parent=31 // pred_region
          %s713 = ssub.s32 16, 16
          %714 = vsyncadd %s701, %s713
          %s715 = smul.addr %s32, 16
          %s716 = scalar_lea.hbm %s3, %s715
          %s718 = sshll.u32 %s703, 4
          %s719 = int_to_ptr.vmem [resolvable:$true] %s718
          %721 = dma.vmem_to_hbm [thread:$0]  %s719, 16, %s716, %s701
        $region52: #{tpu_custom_call.1} parent=31 // pred_fallthru
          _
        // Predicated region
        $region53: #{tpu_custom_call.1} parent=31 // pred_check
          %p722 = pneg %p164
        $region54: #{tpu_custom_call.1} parent=31 // pred_check_branch
          %724 = sbr.rel (%p722) target = $region56
        $region55: #{tpu_custom_call.1} parent=31 // pred_region
          %s726 = ssub.s32 512, 512
          %727 = vsyncadd %s705, %s726
          %s728 = smul.addr %s32, 4
          %s729 = smul.addr %s728, 128
          %s730 = scalar_lea.hbm %s4, %s729
          %s731 = sshll.u32 %s708, 4
          %s732 = int_to_ptr.vmem [resolvable:$true] %s731
          %737 = dma.vmem_to_hbm [thread:$0]  %s732, 512, %s730, %s705, 128, 128, 8
        $region56: #{tpu_custom_call.1} parent=31 // pred_fallthru
          _
      $region32: #{tpu_custom_call.1} parent=5 // pred_fallthru
        _
      %p738 = scmp.le.s32.totalorder 2, %s23
      // Predicated region
      $region57: #{tpu_custom_call.1} parent=5 // pred_check
        %p739 = pneg %p738
      $region58: #{tpu_custom_call.1} parent=5 // pred_check_branch
        %741 = sbr.rel (%p739) target = $region60
      $region59: #{tpu_custom_call.1} parent=5 // pred_region
        %s742 = ssub.s32 %s23, 2
        // Predicated region
        $region61: #{tpu_custom_call.1} parent=59 // pred_check
          %p743 = pneg %p144
        $region62: #{tpu_custom_call.1} parent=59 // pred_check_branch
          %745 = sbr.rel (%p743) target = $region64
        $region63: #{tpu_custom_call.1} parent=59 // pred_region
          %s746 = sand.u32 %s129, 1
          %s747 = scalar_lea.sflag [#allocation6], %s746
          %s748 = sand.u32 %s129, 1
          %s749 = scalar_lea.vmem [#allocation9], %s748
          %750 = dma.done %s747, 16
        $region64: #{tpu_custom_call.1} parent=59 // pred_fallthru
          _
        // Predicated region
        $region65: #{tpu_custom_call.1} parent=59 // pred_check
          %p751 = pneg %p170
        $region66: #{tpu_custom_call.1} parent=59 // pred_check_branch
          %753 = sbr.rel (%p751) target = $region68
        $region67: #{tpu_custom_call.1} parent=59 // pred_region
          %s754 = sand.u32 %s155, 1
          %s755 = scalar_lea.sflag [#allocation11], %s754
          %s756 = sand.u32 %s155, 1
          %s757 = smul.addr %s756, 32
          %s758 = scalar_lea.vmem [#allocation10], %s757
          %759 = dma.done %s755, 512
        $region68: #{tpu_custom_call.1} parent=59 // pred_fallthru
          _
      $region60: #{tpu_custom_call.1} parent=5 // pred_fallthru
        _
    $region6: #{tpu_custom_call.1} parent=1 // loop_footer
      %s27 = sadd.s32 1, %s23
    $region7: #{tpu_custom_call.1} parent=1 // loop_footer_branch
      %22 = sbr.rel target = $region3
    $region8: #{tpu_custom_call.1} parent=1 // loop_exit
      _
    %760 = vsyncpa [#allocation5], 1
    %s761 = scalar_lea.sflag [#allocation5], 1
    %762 = vsyncpa %s761, 1
    %763 = vsyncpa [#allocation8], 1
    %s764 = scalar_lea.sflag [#allocation8], 1
    %765 = vsyncpa %s764, 1
    %766 = vsyncpa [#allocation6], 1
    %s767 = scalar_lea.sflag [#allocation6], 1
    %768 = vsyncpa %s767, 1
    %769 = vsyncpa [#allocation11], 1
    %s770 = scalar_lea.sflag [#allocation11], 1
    %771 = vsyncpa %s770, 1

</llo_original>
